<compile_context>
chip_gen: v6e
topology: v6e:2x2x1
jax: 0.10.0
libtpu: 0.0.40
codegen_flags: <defaults>
</compile_context>

<pallas_src>
import functools

import jax
import jax.numpy as jnp
from jax.experimental import pallas as pl
from jax.experimental.pallas import tpu as pltpu

_MIB = 1024 * 1024


# ---------------------------------------------------------------------------
# Hardware-aware sizing helpers
# ---------------------------------------------------------------------------

def _vmem_capacity_bytes():
    """Physical VMEM per TensorCore; conservative fallback = v7x's 64 MiB."""
    try:
        cap = getattr(pltpu.get_tpu_info(), "vmem_capacity_bytes", None)
        if cap:
            return int(cap)
    except Exception:
        pass
    return 64 * _MIB


def _x_block_budget_bytes(vmem_capacity):
    # Measured tiled-stream curves hit ~85% of HBM roofline at ~1-4 MiB blocks
    # and there is little gain past ~4 MiB, so 4 MiB/buffer is the target on
    # every generation; the capacity term only bites if VMEM were tiny.
    return min(4 * _MIB, vmem_capacity // 8)


def _vmem_limit_bytes(bytes_needed, vmem_capacity):
    # Stay well under v7x's 64 MiB/TC ceiling; v5e/v6e have 128 MiB physical.
    ceiling = min(48 * _MIB, (3 * vmem_capacity) // 4)
    return int(min(ceiling, max(bytes_needed + 8 * _MIB, 32 * _MIB)))


def _round_down8(n):
    return (n // 8) * 8


def _choose_block_rows(total_rows, row_bytes, budget_bytes):
    """Rows per x block sized by bytes: fill ~budget_bytes, multiple of 8
    (f32 sublane), or the full extent if everything already fits."""
    if total_rows * row_bytes <= budget_bytes:
        return int(total_rows)
    rows = _round_down8(budget_bytes // row_bytes)
    return int(max(8, min(rows, total_rows)))


def _maybe_single_buffered(block_shape, index_map, *, single_buffer):
    """Constant-index blocks never need a second VMEM buffer / re-DMA."""
    if single_buffer:
        try:
            return pl.BlockSpec(block_shape, index_map,
                                pipeline_mode=pl.Buffered(1))
        except TypeError:  # Pallas build without pipeline_mode: harmless fallback
            pass
    return pl.BlockSpec(block_shape, index_map)


# ---------------------------------------------------------------------------
# Kernels
# ---------------------------------------------------------------------------

def _packed_kernel(x_ref, w_ref, b_ref, o_ref):
    """Lane-packed path (D divides 128).

    x_ref: (TR, 128)   pack = 128 // D original rows per packed row, streamed
                       in the caller's dtype (f32 or bf16).
    w_ref: (128, pack) block-expanded weight, f32, VMEM-resident.
    b_ref: (1,)        bias scalar in SMEM.
    o_ref: (TR, pack)  f32; element [i, j] == original batch row i*pack + j.
    """
    x = x_ref[...]
    w = w_ref[...]
    # One MXU matmul per block.  N = 128 // D is degenerate for the MXU, but
    # the kernel is HBM-bound and the MXU slot is otherwise idle; this keeps
    # every vreg lane-full and avoids segmented-reduce relayouts.
    y = jnp.dot(x, w, preferred_element_type=jnp.float32)
    o_ref[...] = y + b_ref[0]


def _rowwise_kernel(x_ref, w_ref, b_ref, o_ref, acc_ref, *, d_total, block_d):
    """General path: x (TB, TD) blocks; reduction axis tiled when D is large.

    grid = (batch blocks, D blocks); D axis is "arbitrary" with an f32
    accumulator scratch; bias added and output stored on the last D step.
    """
    d_idx = pl.program_id(1)

    @pl.when(d_idx == 0)
    def _():
        acc_ref[...] = jnp.zeros_like(acc_ref)

    x = x_ref[...].astype(jnp.float32)          # upcast (bf16 stream support)
    w = w_ref[...].astype(jnp.float32)
    prod = x * w                                # VPU; (TB, TD)
    if d_total % block_d != 0:                  # static: mask padded tail cols
        col = d_idx * block_d + jax.lax.broadcasted_iota(
            jnp.int32, prod.shape, dimension=1)
        prod = jnp.where(col < d_total, prod, 0.0)
    acc_ref[...] += jnp.sum(prod, axis=-1, keepdims=True)

    @pl.when(d_idx == pl.num_programs(1) - 1)
    def _():
        o_ref[...] = acc_ref[...] + b_ref[0]


# ---------------------------------------------------------------------------
# Forward wrapper
# ---------------------------------------------------------------------------

def _forward_packed(x, w_row, b, B, D, itemsize, budget, cap, block_rows):
    pack = 128 // D
    rows_pad = (-B) % pack
    if rows_pad:
        # TODO(synk): for huge B with B % pack != 0 this pad is a full copy of
        # x; a separate tail block would avoid it.
        x = jnp.concatenate([x, jnp.zeros((rows_pad, D), x.dtype)], axis=0)
    b_pad = B + rows_pad
    rows = b_pad // pack
    xp = x.reshape(rows, 128)                   # contiguous reshape -> free

    # Block-expanded weight: w_exp[j*D + k, j] = w[k].
    eye = jnp.eye(pack, dtype=jnp.float32)
    w_exp = (eye[:, None, :] * w_row[None, :, None]).reshape(128, pack)

    tr = block_rows if block_rows is not None else _choose_block_rows(
        rows, 128 * itemsize, budget)
    grid = (pl.cdiv(rows, tr),)

    needed = 2 * tr * 128 * itemsize + 2 * tr * pack * 4 + 128 * pack * 4

    out = pl.pallas_call(
        _packed_kernel,
        out_shape=jax.ShapeDtypeStruct((rows, pack), jnp.float32),
        grid_spec=pltpu.PrefetchScalarGridSpec(
            num_scalar_prefetch=0,
            grid=grid,
            in_specs=[
                # x: streamed, double-buffered by the Pallas pipeline.
                # TODO(synk): if xprof shows exposed DMA on v7x (3.2 TB/s HBM),
                # bump this spec to pipeline_mode=pl.Buffered(3).
                pl.BlockSpec((tr, 128), lambda i: (i, 0)),
                # weight: constant index -> single VMEM buffer is enough.
                _maybe_single_buffered((128, pack), lambda i: (0, 0),
                                       single_buffer=True),
                pl.BlockSpec(memory_space=pltpu.MemorySpace.SMEM),   # bias
            ],
            out_specs=pl.BlockSpec((tr, pack), lambda i: (i, 0)),
        ),
        compiler_params=pltpu.CompilerParams(
            dimension_semantics=("parallel",),   # v7x: 2-TC split of the batch
            vmem_limit_bytes=_vmem_limit_bytes(needed, cap),
        ),
    )(xp, w_exp, b)

    return out.reshape(b_pad, 1)[:B]


def _forward_rowwise(x, w_row, b, B, D, itemsize, budget, cap,
                     block_rows, block_dim):
    w = w_row.reshape(1, D)

    if block_dim is not None:
        td = int(block_dim)
    elif 8 * D * itemsize <= budget:
        td = D                                   # whole reduction axis per block
    else:
        # D so large that even an 8-row full-D block would blow the budget:
        # tile the reduction axis too.
        td = max(128, ((budget // (8 * itemsize)) // 128) * 128)

    tb = block_rows if block_rows is not None else _choose_block_rows(
        B, td * itemsize, budget)
    nd = pl.cdiv(D, td)
    grid = (pl.cdiv(B, tb), nd)

    kernel = functools.partial(_rowwise_kernel, d_total=D, block_d=td)
    needed = 2 * tb * td * itemsize + 2 * td * 4 + 2 * tb * 4 + tb * 128 * 4

    return pl.pallas_call(
        kernel,
        out_shape=jax.ShapeDtypeStruct((B, 1), jnp.float32),
        grid_spec=pltpu.PrefetchScalarGridSpec(
            num_scalar_prefetch=0,
            grid=grid,
            in_specs=[
                pl.BlockSpec((tb, td), lambda i, j: (i, j)),      # x: streamed
                _maybe_single_buffered((1, td), lambda i, j: (0, j),
                                       single_buffer=(nd == 1)),  # weight
                pl.BlockSpec(memory_space=pltpu.MemorySpace.SMEM),  # bias
            ],
            out_specs=pl.BlockSpec((tb, 1), lambda i, j: (i, 0)),
            scratch_shapes=[pltpu.VMEM((tb, 1), jnp.float32)],
        ),
        compiler_params=pltpu.CompilerParams(
            dimension_semantics=("parallel", "arbitrary"),
            vmem_limit_bytes=_vmem_limit_bytes(needed, cap),
        ),
    )(x, w, b)


def linear_regression_forward(x, weight, bias, *, block_rows=None, block_dim=None):
    """y = x @ weight.T + bias, matching torch.nn.Linear(input_dim, 1).

    x:      (B, D), float32 or bfloat16 (bf16 is streamed as-is and upcast
            in-kernel; no wrapper-side astype pass over x).
    weight: (1, D) float32 (PyTorch layout).
    bias:   (1,)   float32.
    returns (B, 1) float32.

    block_rows / block_dim override the byte-sized tiles (mainly for tests).
    """
    B, D = x.shape
    w_row = jnp.asarray(weight, jnp.float32).reshape(D)
    b = jnp.asarray(bias, jnp.float32).reshape(1)

    cap = _vmem_capacity_bytes()
    budget = _x_block_budget_bytes(cap)
    itemsize = jnp.dtype(x.dtype).itemsize

    if D <= 128 and 128 % D == 0:
        return _forward_packed(x, w_row, b, B, D, itemsize, budget, cap,
                               block_rows)
    return _forward_rowwise(x, w_row, b, B, D, itemsize, budget, cap,
                            block_rows, block_dim)


if __name__ == "__main__":
    key = jax.random.PRNGKey(0)
    k_w, k_b, k_x1, k_x2, k_x3, k_x4, k_x5 = jax.random.split(key, 7)

    # ---- Packed path (D=32 divides 128), small single-block case -------------
    D = 32
    w = jax.random.normal(k_w, (1, D), dtype=jnp.float32) * 0.1
    b = jax.random.normal(k_b, (1,), dtype=jnp.float32) * 0.1

    x1 = jax.random.normal(k_x1, (8, D), dtype=jnp.float32)
    y1 = jax.block_until_ready(linear_regression_forward(x1, w, b))
    assert y1.shape == (8, 1)
    assert jnp.allclose(y1, x1 @ w.T + b, atol=1e-5, rtol=1e-5)

    # ---- Packed path, multi-block grid (block_rows override forces it) -------
    x2 = jax.random.normal(k_x2, (1024, D), dtype=jnp.float32)
    y2 = jax.block_until_ready(linear_regression_forward(x2, w, b, block_rows=64))
    assert y2.shape == (1024, 1)
    assert jnp.allclose(y2, x2 @ w.T + b, atol=1e-5, rtol=1e-5)

    # ---- Packed path, bf16 streaming (halves HBM read bytes) -----------------
    x2_bf16 = x2.astype(jnp.bfloat16)
    y2b = jax.block_until_ready(linear_regression_forward(x2_bf16, w, b))
    ref_bf16 = x2_bf16.astype(jnp.float32) @ w.T + b
    assert jnp.allclose(y2b, ref_bf16, atol=1e-4, rtol=1e-4)

    # ---- Packed path, batch not a multiple of 128 // D ------------------------
    x3 = jax.random.normal(k_x3, (10, D), dtype=jnp.float32)
    y3 = jax.block_until_ready(linear_regression_forward(x3, w, b))
    assert y3.shape == (10, 1)
    assert jnp.allclose(y3, x3 @ w.T + b, atol=1e-5, rtol=1e-5)

    # ---- Row-wise fallback (D does not divide 128), single D block -----------
    D2 = 96
    w2 = jax.random.normal(k_w, (1, D2), dtype=jnp.float32) * 0.1
    x4 = jax.random.normal(k_x4, (16, D2), dtype=jnp.float32)
    y4 = jax.block_until_ready(linear_regression_forward(x4, w2, b))
    assert jnp.allclose(y4, x4 @ w2.T + b, atol=1e-4, rtol=1e-4)

    # ---- Row-wise fallback with tiled reduction axis (+ tail-column mask) ----
    D3 = 320
    w3 = jax.random.normal(k_w, (1, D3), dtype=jnp.float32) * 0.1
    x5 = jax.random.normal(k_x5, (16, D3), dtype=jnp.float32)
    y5 = jax.block_until_ready(
        linear_regression_forward(x5, w3, b, block_dim=128))
    assert jnp.allclose(y5, x5 @ w3.T + b, atol=1e-4, rtol=1e-4)

    print("KERNEL_OK")
</pallas_src>

<mosaic_0001>
module attributes {stable_mosaic.version = 11 : i64} {
  func.func @_packed_kernel(%arg0: i32, %arg1: memref<2x128xf32, #tpu.memory_space<vmem>>, %arg2: memref<128x4xf32, #tpu.memory_space<vmem>>, %arg3: memref<1xf32, #tpu.memory_space<smem>>, %arg4: memref<2x4xf32, #tpu.memory_space<vmem>>) attributes {dimension_semantics = [#tpu.dimension_semantics<parallel>], iteration_bounds = array<i64: 1>, scalar_prefetch = 0 : i64, scratch_operands = 0 : i64, tpu.core_type = #tpu.core_type<tc>, window_params = [{transform_indices = @transform_0, window_bounds = array<i64: 2, 128>}, {pipeline_mode = #tpu.pipeline_mode<synchronous>, transform_indices = @transform_1, window_bounds = array<i64: 128, 4>}, {transform_indices = @transform_2, window_bounds = array<i64: 1>}, {transform_indices = @transform_3, window_bounds = array<i64: 2, 4>}]} {
    %c0 = arith.constant 0 : index
    %c0_0 = arith.constant 0 : index
    %0 = vector.load %arg1[%c0, %c0_0] : memref<2x128xf32, #tpu.memory_space<vmem>>, vector<2x128xf32>
    %c0_1 = arith.constant 0 : index
    %c0_2 = arith.constant 0 : index
    %1 = vector.load %arg2[%c0_1, %c0_2] : memref<128x4xf32, #tpu.memory_space<vmem>>, vector<128x4xf32>
    %cst = arith.constant dense<0.000000e+00> : vector<2x4xf32>
    %2 = tpu.matmul %0, %1, %cst {dimension_numbers = #tpu.dot_dimension_numbers<[1], [0], [0], [1], [0, 0, 1, 1], [], []>} : vector<2x128xf32>, vector<128x4xf32>, vector<2x4xf32> -> vector<2x4xf32>
    %c0_3 = arith.constant 0 : index
    %3 = memref.load %arg3[%c0_3] : memref<1xf32, #tpu.memory_space<smem>>
    %4 = vector.broadcast %3 : f32 to vector<2x4xf32>
    %5 = arith.addf %2, %4 : vector<2x4xf32>
    %c0_4 = arith.constant 0 : index
    %c0_5 = arith.constant 0 : index
    %6 = vector.load %arg4[%c0_4, %c0_5] : memref<2x4xf32, #tpu.memory_space<vmem>>, vector<2x4xf32>
    tpu.vector_store %arg4[%c0_4, %c0_5], %5 {strides = array<i32>} : memref<2x4xf32, #tpu.memory_space<vmem>>, vector<2x4xf32>,
    return
  }
  func.func @transform_0(%arg0: i32) -> (i32, i32) {
    %c0_i32 = arith.constant 0 : i32
    %c0_i32_0 = arith.constant 0 : i32
    return %arg0, %c0_i32 : i32, i32
  }
  func.func @transform_1(%arg0: i32) -> (i32, i32) {
    %c0_i32 = arith.constant 0 : i32
    %c0_i32_0 = arith.constant 0 : i32
    %c0_i32_1 = arith.constant 0 : i32
    return %c0_i32, %c0_i32_0 : i32, i32
  }
  func.func @transform_2(%arg0: i32) -> i32 {
    %c0_i32 = arith.constant 0 : i32
    %c0_i32_0 = arith.constant 0 : i32
    return %c0_i32 : i32
  }
  func.func @transform_3(%arg0: i32) -> (i32, i32) {
    %c0_i32 = arith.constant 0 : i32
    %c0_i32_0 = arith.constant 0 : i32
    return %arg0, %c0_i32 : i32, i32
  }
}

</mosaic_0001>

<llo_original>
// kernel: tpu_custom_call.1
$region0: #{tpu_custom_call.1}
  #allocation0 [shape = 'u32[]', space=smem, size = 0x4, offset = 0x4, fixed_abs, tag = 'smem constant byte address 0x4 - core index']
  #allocation1 [shape = 'u32[144,128]{1,0:T(1,128)}', space=vmem, size = 0x12000, scoped, tag = 'internal scratch']
  #allocation2 [shape = 'f32[1]{0:T(128)S(6)}', space=smem, size = 0x200, scoped, tag = 'scoped memory for tpu_custom_call.1']
  %s0 = inlined_call_operand.vmem [shape: f32[2,128], index: 0, kind: input, shape index: {}]
  %s1 = inlined_call_operand.vmem [shape: f32[128,4], index: 1, kind: input, shape index: {}]
  %s2 = inlined_call_operand.<no memory space> [shape: f32[1], index: 2, kind: input, shape index: {}]
  %s3 = inlined_call_operand.hbm [shape: f32[2,4], index: 3, kind: output, shape index: {}]
  %s4 = sld [smem:[#allocation0]]
  $region22: #{tpu_custom_call.1} parent=0
    _
  %s6 = ssub.s32 1, %s4
  %s7 = scalar_select 0, %s6, %s4
  %8 = sst [smem:[#allocation2]] %s2
  $region1: #{tpu_custom_call.1} parent=0
    #allocation3 [shape = 'u8[1024]{0}', space=vmem, size = 0x400, scoped, tag = 'output window, operand 0, single buffered']
    #allocation4 [shape = 's32[1]{0}', space=sflag, size = 0x4, scoped, tag = 'scoped memory for tpu_custom_call.1']
    %9 = vsyncpa [#allocation4], 0
    // Predicated region
    $region2: #{tpu_custom_call.1} parent=1 // pred_check
      _
    $region3: #{tpu_custom_call.1} parent=1 // pred_check_branch
      %11 = sbr.rel (0) target = $region5
    $region4: #{tpu_custom_call.1} parent=1 // pred_region
      _
    $region5: #{tpu_custom_call.1} parent=1 // pred_fallthru
      _
    // Predicated region
    $region6: #{tpu_custom_call.1} parent=1 // pred_check
      _
    $region7: #{tpu_custom_call.1} parent=1 // pred_check_branch
      %13 = sbr.rel (0) target = $region9
    $region8: #{tpu_custom_call.1} parent=1 // pred_region
      _
    $region9: #{tpu_custom_call.1} parent=1 // pred_fallthru
      _
    // Predicated region
    $region10: #{tpu_custom_call.1} parent=1 // pred_check
      _
    $region11: #{tpu_custom_call.1} parent=1 // pred_check_branch
      %15 = sbr.rel (0) target = $region13
    $region12: #{tpu_custom_call.1} parent=1 // pred_region
      _
    $region13: #{tpu_custom_call.1} parent=1 // pred_fallthru
      _
    %v16 = vld [vmem:[%s0] sm:$0x3]
    %v17 = vld [vmem:[%s1] sm:$0xff]
    %v18 = vld [vmem:[%s1 + $0x8] sm:$0xff]
    %v19 = vld [vmem:[%s1 + $0x10] sm:$0xff]
    %v20 = vld [vmem:[%s1 + $0x18] sm:$0xff]
    %v21 = vld [vmem:[%s1 + $0x20] sm:$0xff]
    %v22 = vld [vmem:[%s1 + $0x28] sm:$0xff]
    %v23 = vld [vmem:[%s1 + $0x30] sm:$0xff]
    %v24 = vld [vmem:[%s1 + $0x38] sm:$0xff]
    %v25 = vld [vmem:[%s1 + $0x40] sm:$0xff]
    %v26 = vld [vmem:[%s1 + $0x48] sm:$0xff]
    %v27 = vld [vmem:[%s1 + $0x50] sm:$0xff]
    %v28 = vld [vmem:[%s1 + $0x58] sm:$0xff]
    %v29 = vld [vmem:[%s1 + $0x60] sm:$0xff]
    %v30 = vld [vmem:[%s1 + $0x68] sm:$0xff]
    %v31 = vld [vmem:[%s1 + $0x70] sm:$0xff]
    %v32 = vld [vmem:[%s1 + $0x78] sm:$0xff]
    %s33 = sld [smem:[#allocation2]]
    %v34 = vstv %s33
    %35 = vmatprep.subr.mxu0 0.0
    %36 = vmatpush1.msra.mxu0 %v32
    %37 = vmatprep.subr.mxu0 0.0
    %38 = vmatpush1.msra.mxu0 %v31
    %39 = vmatprep.subr.mxu0 0.0
    %40 = vmatpush1.msra.mxu0 %v30
    %41 = vmatprep.subr.mxu0 0.0
    %42 = vmatpush1.msra.mxu0 %v29
    %43 = vmatprep.subr.mxu0 0.0
    %44 = vmatpush1.msra.mxu0 %v28
    %45 = vmatprep.subr.mxu0 0.0
    %46 = vmatpush1.msra.mxu0 %v27
    %47 = vmatprep.subr.mxu0 0.0
    %48 = vmatpush1.msra.mxu0 %v26
    %49 = vmatprep.subr.mxu0 0.0
    %50 = vmatpush1.msra.mxu0 %v25
    %51 = vmatprep.subr.mxu0 0.0
    %52 = vmatpush1.msra.mxu0 %v24
    %53 = vmatprep.subr.mxu0 0.0
    %54 = vmatpush1.msra.mxu0 %v23
    %55 = vmatprep.subr.mxu0 0.0
    %56 = vmatpush1.msra.mxu0 %v22
    %57 = vmatprep.subr.mxu0 0.0
    %58 = vmatpush1.msra.mxu0 %v21
    %59 = vmatprep.subr.mxu0 0.0
    %60 = vmatpush1.msra.mxu0 %v20
    %61 = vmatprep.subr.mxu0 0.0
    %62 = vmatpush1.msra.mxu0 %v19
    %63 = vmatprep.subr.mxu0 0.0
    %64 = vmatpush1.msra.mxu0 %v18
    %65 = vmatprep.subr.mxu0 0.0
    %66 = vmatpush1.msra.mxu0 %v17
    %67 = vmatprep.subr.mxu0 0.0
    %68 = vmatpush2.msra.mxu0 0.0
    %69 = vmatprep.subr.mxu0 0.0
    %70 = vmatpush2.msra.mxu0 0.0
    %71 = vmatprep.subr.mxu0 0.0
    %72 = vmatpush2.msra.mxu0 0.0
    %73 = vmatprep.subr.mxu0 0.0
    %74 = vmatpush2.msra.mxu0 0.0
    %75 = vmatprep.subr.mxu0 0.0
    %76 = vmatpush2.msra.mxu0 0.0
    %77 = vmatprep.subr.mxu0 0.0
    %78 = vmatpush2.msra.mxu0 0.0
    %79 = vmatprep.subr.mxu0 0.0
    %80 = vmatpush2.msra.mxu0 0.0
    %81 = vmatprep.subr.mxu0 0.0
    %82 = vmatpush2.msra.mxu0 0.0
    %83 = vmatprep.subr.mxu0 0.0
    %84 = vmatpush2.msra.mxu0 0.0
    %85 = vmatprep.subr.mxu0 0.0
    %86 = vmatpush2.msra.mxu0 0.0
    %87 = vmatprep.subr.mxu0 0.0
    %88 = vmatpush2.msra.mxu0 0.0
    %89 = vmatprep.subr.mxu0 0.0
    %90 = vmatpush2.msra.mxu0 0.0
    %91 = vmatprep.subr.mxu0 0.0
    %92 = vmatpush2.msra.mxu0 0.0
    %93 = vmatprep.subr.mxu0 0.0
    %94 = vmatpush2.msra.mxu0 0.0
    %95 = vmatprep.subr.mxu0 0.0
    %96 = vmatpush2.msra.mxu0 0.0
    %97 = vmatprep.subr.mxu0 0.0
    %98 = vmatpush2.msra.mxu0 0.0
    %99 = vmatprep.mubr.f32.mxu0 0.0
    %100 = vmatmul.mubr.f32.gmra.mxu0 %v16
    %v101 = vpop.f32.mrf.mxu0
    %v102 = vadd.f32 %v34, %v101
    %v103 = vpop.f32.mrf.mxu0
    %104 = vdwg.mxu0
    %vm105 = vcmask 25600
    %106 = vst.msk [vmem:[#allocation3] sm:$0x3] %vm105, %v102
    // Predicated region
    $region14: #{tpu_custom_call.1} parent=1 // pred_check
      _
    $region15: #{tpu_custom_call.1} parent=1 // pred_check_branch
      %108 = sbr.rel (0) target = $region17
    $region16: #{tpu_custom_call.1} parent=1 // pred_region
      %s110 = ssub.s32 32, 32
      %111 = vsyncadd [#allocation4], %s110
      %s113 = sshll.u32 [#allocation3], 4
      %s114 = int_to_ptr.vmem [resolvable:$true] %s113
      %116 = dma.vmem_to_hbm [thread:$0]  %s114, 32, %s3, [#allocation4]
    $region17: #{tpu_custom_call.1} parent=1 // pred_fallthru
      _
    // Predicated region
    $region18: #{tpu_custom_call.1} parent=1 // pred_check
      _
    $region19: #{tpu_custom_call.1} parent=1 // pred_check_branch
      %118 = sbr.rel (0) target = $region21
    $region20: #{tpu_custom_call.1} parent=1 // pred_region
      %119 = dma.done [#allocation4], 32
    $region21: #{tpu_custom_call.1} parent=1 // pred_fallthru
      _
    %120 = vsyncpa [#allocation4], 1

</llo_original>
